<compile_context>
chip_gen: v6e
topology: v6e:2x2x1
jax: 0.10.0
libtpu: 0.0.40
codegen_flags: <defaults>
</compile_context>

<pallas_src>
import functools

import jax
import jax.numpy as jnp
from jax import lax
from jax.experimental import pallas as pl
from jax.experimental.pallas import tpu as pltpu

_VMEM_LIMIT = 32 * 1024 * 1024   # safe on v5e/v6e/v7x (<= physical everywhere)


def _pick_tm(M):
    # Largest divisor of M that is a multiple of 8 (<=512); otherwise use the
    # full dimension (full-dim blocks are always legal) — no padding needed.
    if M % 8 != 0:
        return M
    for d in range(min(512, M), 7, -8):
        if M % d == 0:
            return d
    return M


def _pick_tn(N):
    # Full-dim N block when it fits comfortably (weights then DMA'd once per
    # matmul); otherwise a 128-aligned tile.
    if N <= 1024:
        return N
    if N % 256 == 0:
        return 256
    if N % 128 == 0:
        return 128
    return N


# ----------------------------------------------------------------- matmul ---
def _matmul_kernel(a_ref, b_ref, o_ref):
    a = a_ref[...].astype(jnp.bfloat16)
    b = b_ref[...].astype(jnp.bfloat16)
    o_ref[...] = jnp.dot(a, b,
                         preferred_element_type=jnp.float32).astype(o_ref.dtype)


@functools.partial(jax.jit, static_argnames=("out_dtype",))
def pallas_matmul(a, b, out_dtype=jnp.bfloat16):
    M, K = a.shape
    _, N = b.shape
    tm = _pick_tm(M)
    tn = _pick_tn(N)
    # Single K step (full-K blocks): no accumulator scratch, no per-K store.
    return pl.pallas_call(
        _matmul_kernel,
        out_shape=jax.ShapeDtypeStruct((M, N), out_dtype),
        grid_spec=pltpu.PrefetchScalarGridSpec(
            num_scalar_prefetch=0,
            grid=(M // tm, N // tn),
            in_specs=[pl.BlockSpec((tm, K), lambda i, j: (i, 0)),
                      pl.BlockSpec((K, tn), lambda i, j: (0, j))],
            out_specs=pl.BlockSpec((tm, tn), lambda i, j: (i, j))),
        compiler_params=pltpu.CompilerParams(
            dimension_semantics=("parallel", "parallel"),
            vmem_limit_bytes=_VMEM_LIMIT),
    )(a, b)


# ------------------------------------------------------- GroupNorm (+SiLU) --
def _gn_kernel(x_ref, g_ref, b_ref, agg_ref, aggt_ref, o_ref, *,
               eps, group_size, act):
    x = x_ref[0].astype(jnp.float32)                       # (HW, C)
    hw = x.shape[0]
    s1 = jnp.sum(x, axis=0, keepdims=True)                 # (1, C)
    s2 = jnp.sum(x * x, axis=0, keepdims=True)             # (1, C)
    A = agg_ref[...]                                       # (C, G)
    AT = aggt_ref[...]                                     # (G, C)
    inv_cnt = 1.0 / float(hw * group_size)
    mu_g = jnp.dot(s1, A, preferred_element_type=jnp.float32) * inv_cnt
    ex2_g = jnp.dot(s2, A, preferred_element_type=jnp.float32) * inv_cnt
    var_g = ex2_g - mu_g * mu_g
    inv_g = lax.rsqrt(var_g + eps)
    mu_c = jnp.dot(mu_g, AT, preferred_element_type=jnp.float32)   # (1, C)
    inv_c = jnp.dot(inv_g, AT, preferred_element_type=jnp.float32)
    y = (x - mu_c) * inv_c
    y = y * g_ref[...] + b_ref[...]
    if act:
        y = y * jax.nn.sigmoid(y)                          # SiLU
    o_ref[0] = y.astype(o_ref.dtype)


@functools.partial(jax.jit, static_argnames=("act",))
def group_norm(x, gamma, beta, *, act):
    # GroupNorm(num_groups=C//8, C), eps=1e-5, optionally fused SiLU.
    # TODO(synk): the normalize+affine apply could be fused into the consumer
    # matmul's A-tile load to save one activation round-trip per GN.
    N, H, W, C = x.shape
    G = C // 8
    HW = H * W
    xf = x.reshape(N, HW, C)
    A = jnp.repeat(jnp.eye(G, dtype=jnp.float32), 8, axis=0)   # (C, G)
    AT = jnp.transpose(A)                                      # (G, C)
    out = pl.pallas_call(
        functools.partial(_gn_kernel, eps=1e-5, group_size=8, act=act),
        out_shape=jax.ShapeDtypeStruct((N, HW, C), jnp.bfloat16),
        grid_spec=pltpu.PrefetchScalarGridSpec(
            num_scalar_prefetch=0,
            grid=(N,),
            in_specs=[pl.BlockSpec((1, HW, C), lambda n: (n, 0, 0)),
                      pl.BlockSpec((1, C), lambda n: (0, 0)),
                      pl.BlockSpec((1, C), lambda n: (0, 0)),
                      pl.BlockSpec((C, G), lambda n: (0, 0)),
                      pl.BlockSpec((G, C), lambda n: (0, 0))],
            out_specs=pl.BlockSpec((1, HW, C), lambda n: (n, 0, 0))),
        compiler_params=pltpu.CompilerParams(
            dimension_semantics=("parallel",),
            vmem_limit_bytes=_VMEM_LIMIT),
    )(xf, gamma.reshape(1, C), beta.reshape(1, C), A, AT)
    return out.reshape(N, H, W, C)


# --------------------------------------------------------- depthwise conv ---
def _dw_kernel(x_ref, w_ref, o_ref, *, kh, kw):
    Ho = o_ref.shape[1]
    Wo = o_ref.shape[2]
    xv = x_ref[0].astype(jnp.float32)                     # (Hp, Wp, C)
    wv = w_ref[...].astype(jnp.float32)                   # (kh, kw, C)
    acc = xv[0:Ho, 0:Wo, :] * wv[0, 0:1, :]
    for ky in range(kh):
        for kx in range(kw):
            if ky == 0 and kx == 0:
                continue
            acc = acc + xv[ky:ky + Ho, kx:kx + Wo, :] * wv[ky, kx:kx + 1, :]
    o_ref[0] = acc.astype(o_ref.dtype)


@functools.partial(jax.jit, static_argnames=("stride", "pad"))
def depthwise_conv(x, w, *, stride, pad):
    # x: (N,H,W,C) bf16; w: (kh,kw,C) bf16.  Dense stride-1 output computed
    # in-kernel (f32 accumulation); strided subsampling done outside.
    # TODO(synk): compute the strided output in-kernel for the few stride-2
    # layers to avoid the dense intermediate (4x compute on those layers).
    N, H, W, C = x.shape
    kh, kw, _ = w.shape
    xp = jnp.pad(x, ((0, 0), (pad, pad), (pad, pad), (0, 0)))
    Hp, Wp = H + 2 * pad, W + 2 * pad
    Ho1, Wo1 = Hp - kh + 1, Wp - kw + 1
    out = pl.pallas_call(
        functools.partial(_dw_kernel, kh=kh, kw=kw),
        out_shape=jax.ShapeDtypeStruct((N, Ho1, Wo1, C), jnp.bfloat16),
        grid_spec=pltpu.PrefetchScalarGridSpec(
            num_scalar_prefetch=0,
            grid=(N,),
            in_specs=[pl.BlockSpec((1, Hp, Wp, C), lambda n: (n, 0, 0, 0)),
                      pl.BlockSpec((kh, kw, C), lambda n: (0, 0, 0))],
            out_specs=pl.BlockSpec((1, Ho1, Wo1, C), lambda n: (n, 0, 0, 0))),
        compiler_params=pltpu.CompilerParams(
            dimension_semantics=("parallel",),
            vmem_limit_bytes=_VMEM_LIMIT),
    )(xp, w)
    if stride > 1:
        out = out[:, ::stride, ::stride, :]
    return out


# ----------------------------------------------------- multi-query attention
def _mqa_kernel(q_ref, k_ref, v_ref, o_ref, *, scale):
    q = q_ref[0]                                  # (heads*Sq, dh) bf16
    k = k_ref[0]                                  # (Skv, dh)      bf16
    v = v_ref[0]                                  # (Skv, dh)      bf16
    s = lax.dot_general(q, k, (((1,), (1,)), ((), ())),
                        preferred_element_type=jnp.float32) * scale
    m = jnp.max(s, axis=-1, keepdims=True)
    p = jnp.exp(s - m)
    p = p * pl.reciprocal(jnp.sum(p, axis=-1, keepdims=True), approx=True)
    o_ref[0] = jnp.dot(p.astype(v.dtype), v,
                       preferred_element_type=jnp.float32).astype(o_ref.dtype)


@functools.partial(jax.jit, static_argnames=("num_heads",))
def mqa_attention(q, k, v, *, num_heads):
    # q: (N, Sq, num_heads*dh); k, v: (N, Skv, dh) shared across heads (MQA).
    # All heads are processed in one grid step: rows of Q are (position, head)
    # pairs — softmax/PV are row-wise so no transpose is needed and K/V are
    # DMA'd once per image instead of once per head.
    N, Sq, C = q.shape
    dh = C // num_heads
    Skv = k.shape[1]
    qh = q.reshape(N, Sq * num_heads, dh)
    out = pl.pallas_call(
        functools.partial(_mqa_kernel, scale=1.0 / float(dh) ** 0.5),
        out_shape=jax.ShapeDtypeStruct((N, Sq * num_heads, dh), jnp.bfloat16),
        grid_spec=pltpu.PrefetchScalarGridSpec(
            num_scalar_prefetch=0,
            grid=(N,),
            in_specs=[pl.BlockSpec((1, Sq * num_heads, dh),
                                   lambda n: (n, 0, 0)),
                      pl.BlockSpec((1, Skv, dh), lambda n: (n, 0, 0)),
                      pl.BlockSpec((1, Skv, dh), lambda n: (n, 0, 0))],
            out_specs=pl.BlockSpec((1, Sq * num_heads, dh),
                                   lambda n: (n, 0, 0))),
        compiler_params=pltpu.CompilerParams(
            dimension_semantics=("parallel",)),
    )(qh, k, v)
    return out.reshape(N, Sq, C)


# ---------------------------------------------------------------- avgpool ---
def _avgpool_kernel(x_ref, o_ref, *, kh, kw):
    win = x_ref[0].astype(jnp.float32)               # (kh, kw, C)
    s = jnp.sum(win, axis=0)                         # (kw, C)
    s = jnp.sum(s, axis=0, keepdims=True)            # (1, C)
    o_ref[0, 0] = (s * (1.0 / float(kh * kw))).astype(o_ref.dtype)


@jax.jit
def avg_pool_8(x):
    # PyTorch AvgPool2d((8,8)) (stride 8, no padding): for 8 <= H,W < 16 the
    # output is 1x1, averaging the top-left 8x8 window over exactly 64 elems.
    x = x[:, :8, :8, :]
    N, H, W, C = x.shape
    return pl.pallas_call(
        functools.partial(_avgpool_kernel, kh=8, kw=8),
        out_shape=jax.ShapeDtypeStruct((N, 1, 1, C), jnp.bfloat16),
        grid_spec=pltpu.PrefetchScalarGridSpec(
            num_scalar_prefetch=0,
            grid=(N,),
            in_specs=[pl.BlockSpec((1, 8, 8, C), lambda n: (n, 0, 0, 0))],
            out_specs=pl.BlockSpec((1, 1, 1, C), lambda n: (n, 0, 0, 0))),
        compiler_params=pltpu.CompilerParams(
            dimension_semantics=("parallel",)),
    )(x)


# ----------------------------------------------------------- conv wrappers --
def conv1x1(x, w, out_dtype=jnp.bfloat16):
    N, H, W, Cin = x.shape
    y = pallas_matmul(x.reshape(N * H * W, Cin), w, out_dtype=out_dtype)
    return y.reshape(N, H, W, w.shape[1])


@functools.partial(jax.jit, static_argnames=("kh", "kw", "stride", "pad"))
def conv2d_im2col(x, w, kh, kw, stride, pad):
    # Full (groups=1) conv via im2col slicing (glue) + Pallas matmul.
    # TODO(synk): fuse the im2col tap gather into the matmul grid to avoid
    # materializing the kh*kw-wide patches tensor for the two stem-side convs.
    N, H, W, Cin = x.shape
    xp = jnp.pad(x, ((0, 0), (pad, pad), (pad, pad), (0, 0)))
    Ho = (H + 2 * pad - kh) // stride + 1
    Wo = (W + 2 * pad - kw) // stride + 1
    cols = []
    for i in range(kh):
        for j in range(kw):
            cols.append(xp[:, i:i + stride * Ho:stride,
                           j:j + stride * Wo:stride, :])
    patches = jnp.concatenate(cols, axis=-1)             # (N,Ho,Wo,kh*kw*Cin)
    y = pallas_matmul(patches.reshape(N * Ho * Wo, kh * kw * Cin), w)
    return y.reshape(N, Ho, Wo, w.shape[1])


# ---------------------------------------------------------------- params ----
class _KeyGen:
    def __init__(self, key):
        self._key = key

    def __call__(self):
        self._key, sub = jax.random.split(self._key)
        return sub


def _conv_w(kg, fan_in, cout):
    w = jax.random.normal(kg(), (fan_in, cout), jnp.float32) * (fan_in ** -0.5)
    return w.astype(jnp.bfloat16)


def _dw_w(kg, k, c):
    w = jax.random.normal(kg(), (k, k, c), jnp.float32) * (1.0 / k)
    return w.astype(jnp.bfloat16)


def _gn_p(kg, c):
    g = 1.0 + 0.1 * jax.random.normal(kg(), (c,), jnp.float32)
    b = 0.1 * jax.random.normal(kg(), (c,), jnp.float32)
    return g, b


# ------------------------------------------------------------ model config --
STAGES = [
    [("stem", 3, 32, 3, 2, 1)],
    [("fused_ib", 32, 48, 128, 3, 2, 1)],
    [("extra_dw", 48, 80, 192, 3, 5, 2, 1, 2),
     ("extra_dw", 80, 80, 160, 3, 3, 1, 1, 2)],
    [("extra_dw", 80, 160, 480, 3, 5, 2, 1, 2),
     ("extra_dw", 160, 160, 640, 3, 3, 1, 1, 1),
     ("extra_dw", 160, 160, 640, 3, 3, 1, 1, 1),
     ("extra_dw", 160, 160, 640, 3, 5, 1, 1, 2),
     ("mqa", 160, 4, True),
     ("extra_dw", 160, 160, 640, 3, 3, 1, 1, 1),
     ("mqa", 160, 4, True),
     ("convnext", 160, 160, 640, 3, 1, 1),
     ("mqa", 160, 4, True),
     ("ffn", 160, 160, 640),
     ("mqa", 160, 4, True),
     ("convnext", 160, 160, 640, 3, 1, 1)],
    [("extra_dw", 160, 256, 960, 5, 5, 2, 2, 2),
     ("extra_dw", 256, 256, 1024, 5, 5, 1, 2, 2),
     ("extra_dw", 256, 256, 1024, 3, 5, 1, 1, 2),
     ("extra_dw", 256, 256, 1024, 3, 5, 1, 1, 2),
     ("ffn", 256, 256, 1024),
     ("convnext", 256, 256, 1024, 3, 1, 1),
     ("extra_dw", 256, 256, 512, 3, 5, 1, 1, 2),
     ("mqa", 256, 4, False),
     ("extra_dw", 256, 256, 1024, 5, 5, 1, 2, 2),
     ("mqa", 256, 4, False),
     ("ffn", 256, 256, 1024),
     ("mqa", 256, 4, False),
     ("ffn", 256, 256, 1024),
     ("mqa", 256, 4, False),
     ("convnext", 256, 256, 1024, 5, 1, 2)],
    [("head", 256, 960, 1280, 1000)],
]


def init_block(kg, spec):
    t = spec[0]
    if t == "stem":
        _, cin, cout, k, _, _ = spec
        g, b = _gn_p(kg, cout)
        return {"w": _conv_w(kg, k * k * cin, cout), "g": g, "b": b}
    if t == "fused_ib":
        _, cin, cout, exp, k, _, _ = spec
        g1, b1 = _gn_p(kg, exp)
        g2, b2 = _gn_p(kg, cout)
        return {"w1": _conv_w(kg, k * k * cin, exp), "g1": g1, "b1": b1,
                "w2": _conv_w(kg, exp, cout), "g2": g2, "b2": b2}
    if t == "extra_dw":
        _, cin, cout, exp, k1, k2, _, _, _ = spec
        g1, b1 = _gn_p(kg, cin)
        g2, b2 = _gn_p(kg, exp)
        g3, b3 = _gn_p(kg, exp)
        g4, b4 = _gn_p(kg, cout)
        return {"dw1": _dw_w(kg, k1, cin), "w_exp": _conv_w(kg, cin, exp),
                "dw2": _dw_w(kg, k2, exp), "w_proj": _conv_w(kg, exp, cout),
                "g1": g1, "b1": b1, "g2": g2, "b2": b2,
                "g3": g3, "b3": b3, "g4": g4, "b4": b4}
    if t == "convnext":
        _, cin, cout, exp, k, _, _ = spec
        g1, b1 = _gn_p(kg, cin)
        g2, b2 = _gn_p(kg, exp)
        g3, b3 = _gn_p(kg, cout)
        return {"dw": _dw_w(kg, k, cin), "w_exp": _conv_w(kg, cin, exp),
                "w_proj": _conv_w(kg, exp, cout),
                "g1": g1, "b1": b1, "g2": g2, "b2": b2, "g3": g3, "b3": b3}
    if t == "ffn":
        _, cin, cout, exp = spec
        g1, b1 = _gn_p(kg, exp)
        g2, b2 = _gn_p(kg, cout)
        return {"w1": _conv_w(kg, cin, exp), "w2": _conv_w(kg, exp, cout),
                "g1": g1, "b1": b1, "g2": g2, "b2": b2}
    if t == "mqa":
        _, c, heads, ds = spec
        dh = c // heads
        gi, bi = _gn_p(kg, c)
        p = {"g_in": gi, "b_in": bi,
             "wq": _conv_w(kg, c, c), "wk": _conv_w(kg, c, dh),
             "wv": _conv_w(kg, c, dh), "wo": _conv_w(kg, c, c)}
        if ds:
            p["dw_kv"] = _dw_w(kg, 3, c)
        return p
    if t == "head":
        _, cin, c1, c2, ncls = spec
        g1, b1 = _gn_p(kg, c1)
        g2, b2 = _gn_p(kg, c2)
        return {"w1": _conv_w(kg, cin, c1), "g1": g1, "b1": b1,
                "w2": _conv_w(kg, c1, c2), "g2": g2, "b2": b2,
                "w3": _conv_w(kg, c2, ncls),
                "b3": 0.01 * jax.random.normal(kg(), (ncls,), jnp.float32)}
    raise ValueError(t)


def block_fwd(x, spec, p):
    t = spec[0]
    if t == "stem":
        _, _, _, k, s, pad = spec
        x = conv2d_im2col(x, p["w"], k, k, s, pad)
        return group_norm(x, p["g"], p["b"], act=True)
    if t == "fused_ib":
        _, _, _, _, k, s, pad = spec
        x = conv2d_im2col(x, p["w1"], k, k, s, pad)
        x = group_norm(x, p["g1"], p["b1"], act=True)
        x = conv1x1(x, p["w2"])
        return group_norm(x, p["g2"], p["b2"], act=False)
    if t == "extra_dw":
        _, _, _, _, _, _, s, p1, p2 = spec
        x = depthwise_conv(x, p["dw1"], stride=s, pad=p1)
        x = group_norm(x, p["g1"], p["b1"], act=False)
        x = conv1x1(x, p["w_exp"])
        x = group_norm(x, p["g2"], p["b2"], act=True)
        x = depthwise_conv(x, p["dw2"], stride=1, pad=p2)
        x = group_norm(x, p["g3"], p["b3"], act=True)
        x = conv1x1(x, p["w_proj"])
        return group_norm(x, p["g4"], p["b4"], act=False)
    if t == "convnext":
        _, cin, cout, _, _, s, pad = spec
        r = x
        x = depthwise_conv(x, p["dw"], stride=s, pad=pad)
        x = group_norm(x, p["g1"], p["b1"], act=False)
        x = conv1x1(x, p["w_exp"])
        x = group_norm(x, p["g2"], p["b2"], act=True)
        x = conv1x1(x, p["w_proj"])
        x = group_norm(x, p["g3"], p["b3"], act=False)
        if cin == cout and s == 1:
            x = x + r
        return x
    if t == "ffn":
        r = x
        x = conv1x1(x, p["w1"])
        x = group_norm(x, p["g1"], p["b1"], act=True)
        x = conv1x1(x, p["w2"])
        x = group_norm(x, p["g2"], p["b2"], act=False)
        return x + r
    if t == "mqa":
        _, c, heads, ds = spec
        N, H, W, C = x.shape
        r = x
        xn = group_norm(x, p["g_in"], p["b_in"], act=False)
        q = conv1x1(xn, p["wq"])
        kv = depthwise_conv(xn, p["dw_kv"], stride=2, pad=1) if ds else xn
        k = conv1x1(kv, p["wk"])
        v = conv1x1(kv, p["wv"])
        dh = C // heads
        Sq = H * W
        Skv = k.shape[1] * k.shape[2]
        o = mqa_attention(q.reshape(N, Sq, C),
                          k.reshape(N, Skv, dh),
                          v.reshape(N, Skv, dh), num_heads=heads)
        o = conv1x1(o.reshape(N, H, W, C), p["wo"])
        return o + r
    if t == "head":
        x = conv1x1(x, p["w1"])
        x = group_norm(x, p["g1"], p["b1"], act=True)
        x = avg_pool_8(x)
        x = conv1x1(x, p["w2"])
        x = group_norm(x, p["g2"], p["b2"], act=True)
        x = conv1x1(x, p["w3"], out_dtype=jnp.float32) + p["b3"]
        return x.reshape(x.shape[0], -1)
    raise ValueError(t)


def init_model(key):
    kg = _KeyGen(key)
    return [[init_block(kg, spec) for spec in stage] for stage in STAGES]


def forward(params, x):
    x = x.astype(jnp.bfloat16)
    for stage_specs, stage_params in zip(STAGES, params):
        for spec, p in zip(stage_specs, stage_params):
            x = block_fwd(x, spec, p)
    return x


if __name__ == "__main__":
    params = init_model(jax.random.PRNGKey(1234))
    # Smallest input consistent with the architecture (the AvgPool2d((8,8))
    # head needs an >=8x8 feature map, which 224x224 input yields), batch=2.
    x_nchw = jax.random.normal(jax.random.PRNGKey(0), (2, 3, 224, 224),
                               jnp.float32)
    x = jnp.transpose(x_nchw, (0, 2, 3, 1))     # NCHW -> NHWC
    out = forward(params, x)
    out = jax.block_until_ready(out)
    assert out.shape == (2, 1000), out.shape
    print("KERNEL_OK")
</pallas_src>

<mosaic_0001>
module attributes {stable_mosaic.version = 11 : i64} {
  func.func @_matmul_kernel(%arg0: i32, %arg1: i32, %arg2: memref<512x27xbf16, #tpu.memory_space<vmem>>, %arg3: memref<27x32xbf16, #tpu.memory_space<vmem>>, %arg4: memref<512x32xbf16, #tpu.memory_space<vmem>>) attributes {dimension_semantics = [#tpu.dimension_semantics<parallel>, #tpu.dimension_semantics<parallel>], iteration_bounds = array<i64: 49, 1>, scalar_prefetch = 0 : i64, scratch_operands = 0 : i64, tpu.core_type = #tpu.core_type<tc>, window_params = [{transform_indices = @transform_0, window_bounds = array<i64: 512, 27>}, {transform_indices = @transform_1, window_bounds = array<i64: 27, 32>}, {transform_indices = @transform_2, window_bounds = array<i64: 512, 32>}]} {
    %c0 = arith.constant 0 : index
    %c0_0 = arith.constant 0 : index
    %0 = vector.load %arg2[%c0, %c0_0] : memref<512x27xbf16, #tpu.memory_space<vmem>>, vector<512x27xbf16>
    %c0_1 = arith.constant 0 : index
    %c0_2 = arith.constant 0 : index
    %1 = vector.load %arg3[%c0_1, %c0_2] : memref<27x32xbf16, #tpu.memory_space<vmem>>, vector<27x32xbf16>
    %cst = arith.constant dense<0.000000e+00> : vector<512x32xf32>
    %2 = tpu.matmul %0, %1, %cst {dimension_numbers = #tpu.dot_dimension_numbers<[1], [0], [0], [1], [0, 0, 1, 1], [], []>} : vector<512x27xbf16>, vector<27x32xbf16>, vector<512x32xf32> -> vector<512x32xf32>
    %3 = arith.truncf %2 : vector<512x32xf32> to vector<512x32xbf16>
    %c0_3 = arith.constant 0 : index
    %c0_4 = arith.constant 0 : index
    %4 = vector.load %arg4[%c0_3, %c0_4] : memref<512x32xbf16, #tpu.memory_space<vmem>>, vector<512x32xbf16>
    tpu.vector_store %arg4[%c0_3, %c0_4], %3 {strides = array<i32>} : memref<512x32xbf16, #tpu.memory_space<vmem>>, vector<512x32xbf16>,
    return
  }
  func.func @transform_0(%arg0: i32, %arg1: i32) -> (i32, i32) {
    %c0_i32 = arith.constant 0 : i32
    %c0_i32_0 = arith.constant 0 : i32
    return %arg0, %c0_i32 : i32, i32
  }
  func.func @transform_1(%arg0: i32, %arg1: i32) -> (i32, i32) {
    %c0_i32 = arith.constant 0 : i32
    %c0_i32_0 = arith.constant 0 : i32
    return %c0_i32, %arg1 : i32, i32
  }
  func.func @transform_2(%arg0: i32, %arg1: i32) -> (i32, i32) {
    %c0_i32 = arith.constant 0 : i32
    return %arg0, %arg1 : i32, i32
  }
}

</mosaic_0001>

<llo_original>
// kernel: pallas_matmul.1
$region0: #{pallas_matmul.1}
  #allocation0 [shape = 'u32[]', space=smem, size = 0x4, offset = 0x4, fixed_abs, tag = 'smem constant byte address 0x4 - core index']
  #allocation1 [shape = 'u32[144,128]{1,0:T(1,128)}', space=vmem, size = 0x12000, scoped, tag = 'internal scratch']
  %s0 = inlined_call_operand.vmem [shape: bf16[25088,27], index: 0, kind: input, shape index: {}]
  %s1 = inlined_call_operand.vmem [shape: bf16[27,32], index: 1, kind: input, shape index: {}]
  %s2 = inlined_call_operand.vmem [shape: bf16[25088,32], index: 2, kind: output, shape index: {}]
  %s3 = sld [smem:[#allocation0]]
  $region41: #{pallas_matmul.1} parent=0
    _
  %s5 = ssub.s32 1, %s3
  %s6 = scalar_select 0, %s5, %s3
  loop: start=0, step=1, limit=51
  $region2: #{pallas_matmul.1} parent=0 // loop_pre_header
    _
  $region3: #{pallas_matmul.1} parent=0 // loop_header
    %s8 = sphi 0, %s12
    %p9 = scmp.ge.s32.totalorder %s8, 51
    %s15 = sphi 0, %s27
    %s16 = sphi 0, %s23
    %s17 = sphi 0, %s15
    %s18 = sphi 0, %s16
    %s19 = sphi 0, %s17
    %s20 = sphi 0, %s18
    %s30 = sphi 0, %s32
    %s33 = sphi 0, %s30
    %s34 = sphi 0, %s33
    %s50 = sphi 0, %s34
    %s56 = sphi 0, %s58
    %s59 = sphi 0, %s56
    %s60 = sphi 0, %s59
    %s76 = sphi 0, %s60
    %s84 = sphi 0, %s86
    %s87 = sphi 0, %s84
    %s88 = sphi 0, %s87
    %s104 = sphi 0, %s88
  $region4: #{pallas_matmul.1} parent=0 // loop_header_branch
    %11 = sbr.rel (%p9) target = $region8
  $region5: #{pallas_matmul.1} parent=0 // loop_body
    %s13 = ssub.s32 %s8, 1
    %s14 = ssub.s32 %s8, 2
    %s21 = sadd.s32 1, %s16
    %p22 = scmp.ge.s32.totalorder %s21, 1
    %s23 = scalar_select %p22, 0, %s21
    %s24 = sadd.s32 1, %s15
    %s25 = scalar_select %p22, %s24, %s15
    %p26 = scmp.ge.s32.totalorder %s25, 49
    %s27 = scalar_select %p26, 0, %s25
    %s28 = ssub.s32 %s15, %s27
    %p29 = scmp.eq.s32.totalorder %s28, 0
    %s31 = sadd.s32 %s30, 1
    %s32 = scalar_select %p29, %s30, %s31
    %p35 = pneg %p29
    %p36 = scmp.eq.s32.totalorder %s8, 48
    %p37 = por %p35, %p36
    %p38 = scmp.ne.s32.totalorder %s30, %s33
    %p39 = scmp.eq.s32.totalorder %s8, 0
    %p40 = por %p38, %p39
    %p41 = scmp.ne.s32.totalorder %s30, %s33
    %p42 = scmp.eq.s32.totalorder %s13, 48
    %p43 = por %p41, %p42
    %p44 = scmp.ne.s32.totalorder %s33, %s34
    %p45 = scmp.eq.s32.totalorder %s13, 0
    %p46 = por %p44, %p45
    %p47 = scmp.ne.s32.totalorder %s33, %s34
    %p48 = scmp.eq.s32.totalorder %s14, 48
    %p49 = por %p47, %p48
    %p51 = scmp.ne.s32.totalorder %s34, %s50
    %p52 = scmp.eq.s32.totalorder %s14, 0
    %p53 = por %p51, %p52
    %s54 = ssub.s32 %s16, %s23
    %p55 = scmp.eq.s32.totalorder %s54, 0
    %s57 = sadd.s32 %s56, 1
    %s58 = scalar_select %p55, %s56, %s57
    %p61 = pneg %p55
    %p62 = scmp.eq.s32.totalorder %s8, 48
    %p63 = por %p61, %p62
    %p64 = scmp.ne.s32.totalorder %s56, %s59
    %p65 = scmp.eq.s32.totalorder %s8, 0
    %p66 = por %p64, %p65
    %p67 = scmp.ne.s32.totalorder %s56, %s59
    %p68 = scmp.eq.s32.totalorder %s13, 48
    %p69 = por %p67, %p68
    %p70 = scmp.ne.s32.totalorder %s59, %s60
    %p71 = scmp.eq.s32.totalorder %s13, 0
    %p72 = por %p70, %p71
    %p73 = scmp.ne.s32.totalorder %s59, %s60
    %p74 = scmp.eq.s32.totalorder %s14, 48
    %p75 = por %p73, %p74
    %p77 = scmp.ne.s32.totalorder %s60, %s76
    %p78 = scmp.eq.s32.totalorder %s14, 0
    %p79 = por %p77, %p78
    %s80 = ssub.s32 %s15, %s27
    %s81 = ssub.s32 %s16, %s23
    %s82 = sor.u32 %s80, %s81
    %p83 = scmp.eq.s32.totalorder %s82, 0
    %s85 = sadd.s32 %s84, 1
    %s86 = scalar_select %p83, %s84, %s85
    %p89 = pneg %p83
    %p90 = scmp.eq.s32.totalorder %s8, 48
    %p91 = por %p89, %p90
    %p92 = scmp.ne.s32.totalorder %s84, %s87
    %p93 = scmp.eq.s32.totalorder %s8, 0
    %p94 = por %p92, %p93
    %p95 = scmp.ne.s32.totalorder %s84, %s87
    %p96 = scmp.eq.s32.totalorder %s13, 48
    %p97 = por %p95, %p96
    %p98 = scmp.ne.s32.totalorder %s87, %s88
    %p99 = scmp.eq.s32.totalorder %s13, 0
    %p100 = por %p98, %p99
    %p101 = scmp.ne.s32.totalorder %s87, %s88
    %p102 = scmp.eq.s32.totalorder %s14, 48
    %p103 = por %p101, %p102
    %p105 = scmp.ne.s32.totalorder %s88, %s104
    %p106 = scmp.eq.s32.totalorder %s14, 0
    %p107 = por %p105, %p106
    %p108 = scmp.le.s32.totalorder 1, %s8
    %p109 = scmp.lt.s32.totalorder %s8, 50
    %p110 = pnand %p108, %p109
    %p111 = pneg %p110
    // Predicated region
    $region9: #{pallas_matmul.1} parent=5 // pred_check
      _
    $region10: #{pallas_matmul.1} parent=5 // pred_check_branch
      %113 = sbr.rel (%p110) target = $region12
    $region11: #{pallas_matmul.1} parent=5 // pred_region
      %s114 = ssub.s32 %s8, 1
      // Predicated region
      $region13: #{pallas_matmul.1} parent=11 // pred_check
        %p115 = pneg %p72
      $region14: #{pallas_matmul.1} parent=11 // pred_check_branch
        %117 = sbr.rel (%p115) target = $region16
      $region15: #{pallas_matmul.1} parent=11 // pred_region
        %p118 = scmp.lt.s32.totalorder %s18, 0
        %s119 = scalar_select %p118, %s18, 0
        %s120 = smul.addr %s119, 4
        %s121 = scalar_lea.vmem %s1, %s120
      $region16: #{pallas_matmul.1} parent=11 // pred_fallthru
        _
    $region12: #{pallas_matmul.1} parent=5 // pred_fallthru
      _
    %p122 = scmp.lt.s32.totalorder %s8, 49
    // Predicated region
    $region17: #{pallas_matmul.1} parent=5 // pred_check
      %p123 = pneg %p122
    $region18: #{pallas_matmul.1} parent=5 // pred_check_branch
      %125 = sbr.rel (%p123) target = $region20
    $region19: #{pallas_matmul.1} parent=5 // pred_region
      // Predicated region
      $region21: #{pallas_matmul.1} parent=19 // pred_check
        %p126 = pneg %p40
      $region22: #{pallas_matmul.1} parent=19 // pred_check_branch
        %128 = sbr.rel (%p126) target = $region24
      $region23: #{pallas_matmul.1} parent=19 // pred_region
        %s129 = smul.u32 64, %s15
        %p130 = scmp.lt.s32.totalorder %s129, 3135
        %s131 = scalar_select %p130, %s129, 3135
        %s132 = smul.addr %s131, 4
        %s133 = scalar_lea.vmem %s0, %s132
        %s134 = smul.u32 64, %s15
      $region24: #{pallas_matmul.1} parent=19 // pred_fallthru
        _
    $region20: #{pallas_matmul.1} parent=5 // pred_fallthru
      _
    %p135 = scmp.le.s32.totalorder 1, %s8
    %p136 = scmp.lt.s32.totalorder %s8, 50
    %p137 = pnand %p135, %p136
    %p138 = pneg %p137
    // Predicated region
    $region25: #{pallas_matmul.1} parent=5 // pred_check
      _
    $region26: #{pallas_matmul.1} parent=5 // pred_check_branch
      %140 = sbr.rel (%p137) target = $region28
    $region27: #{pallas_matmul.1} parent=5 // pred_region
      %s141 = ssub.s32 %s8, 1
      %s142 = smul.u32 64, %s17
      %p143 = scmp.lt.s32.totalorder %s142, 3135
      %s144 = scalar_select %p143, %s142, 3135
      %s145 = smul.addr %s144, 4
      %s146 = scalar_lea.vmem %s0, %s145
      %p147 = pneg %p46
      %p148 = pneg %p43
      %p149 = scmp.lt.s32.totalorder %s18, 0
      %s150 = scalar_select %p149, %s18, 0
      %s151 = smul.addr %s150, 4
      %s152 = scalar_lea.vmem %s1, %s151
      %p153 = pneg %p72
      %p154 = pneg %p69
      %p155 = pneg %p100
      %p156 = pneg %p97
      %s157 = smul.u32 64, %s17
      %p158 = scmp.lt.s32.totalorder %s157, 3135
      %s159 = scalar_select %p158, %s157, 3135
      %p160 = scmp.lt.s32.totalorder %s18, 0
      %s161 = scalar_select %p160, %s18, 0
      %s162 = sadd.s32 %s161, %s159
      %s163 = smul.addr %s162, 4
      %s164 = scalar_lea.vmem %s2, %s163
      %s165 = smul.u32 64, %s17
      %p166 = scmp.lt.s32.totalorder %s165, 3135
      %s167 = scalar_select %p166, %s165, 3135
      %s168 = smul.addr %s167, 4
      %s169 = scalar_lea.vmem %s0, %s168
      %s170 = smul.u32 64, %s17
      %p171 = scmp.lt.s32.totalorder %s18, 0
      %s172 = scalar_select %p171, %s18, 0
      %s173 = smul.addr %s172, 4
      %s174 = scalar_lea.vmem %s1, %s173
      %s175 = smul.u32 64, %s17
      %p176 = scmp.lt.s32.totalorder %s175, 3135
      %s177 = scalar_select %p176, %s175, 3135
      %p178 = scmp.lt.s32.totalorder %s18, 0
      %s179 = scalar_select %p178, %s18, 0
      %s180 = sadd.s32 %s179, %s177
      %s181 = smul.addr %s180, 4
      %s182 = scalar_lea.vmem %s2, %s181
      %s183 = smul.u32 64, %s17
      %v185 = vld [vmem:[%s169] sm:$0xf]
      %v186 = vld [vmem:[%s169 + $0x4] sm:$0xf]
      %v187 = vld [vmem:[%s169 + $0x8] sm:$0xf]
      %v188 = vld [vmem:[%s169 + $0xc] sm:$0xf]
      %v189 = vld [vmem:[%s169 + $0x10] sm:$0xf]
      %v190 = vld [vmem:[%s169 + $0x14] sm:$0xf]
      %v191 = vld [vmem:[%s169 + $0x18] sm:$0xf]
      %v192 = vld [vmem:[%s169 + $0x1c] sm:$0xf]
      %v193 = vld [vmem:[%s169 + $0x20] sm:$0xf]
      %v194 = vld [vmem:[%s169 + $0x24] sm:$0xf]
      %v195 = vld [vmem:[%s169 + $0x28] sm:$0xf]
      %v196 = vld [vmem:[%s169 + $0x2c] sm:$0xf]
      %v197 = vld [vmem:[%s169 + $0x30] sm:$0xf]
      %v198 = vld [vmem:[%s169 + $0x34] sm:$0xf]
      %v199 = vld [vmem:[%s169 + $0x38] sm:$0xf]
      %v200 = vld [vmem:[%s169 + $0x3c] sm:$0xf]
      %v201 = vld [vmem:[%s169 + $0x40] sm:$0xf]
      %v202 = vld [vmem:[%s169 + $0x44] sm:$0xf]
      %v203 = vld [vmem:[%s169 + $0x48] sm:$0xf]
      %v204 = vld [vmem:[%s169 + $0x4c] sm:$0xf]
      %v205 = vld [vmem:[%s169 + $0x50] sm:$0xf]
      %v206 = vld [vmem:[%s169 + $0x54] sm:$0xf]
      %v207 = vld [vmem:[%s169 + $0x58] sm:$0xf]
      %v208 = vld [vmem:[%s169 + $0x5c] sm:$0xf]
      %v209 = vld [vmem:[%s169 + $0x60] sm:$0xf]
      %v210 = vld [vmem:[%s169 + $0x64] sm:$0xf]
      %v211 = vld [vmem:[%s169 + $0x68] sm:$0xf]
      %v212 = vld [vmem:[%s169 + $0x6c] sm:$0xf]
      %v213 = vld [vmem:[%s169 + $0x70] sm:$0xf]
      %v214 = vld [vmem:[%s169 + $0x74] sm:$0xf]
      %v215 = vld [vmem:[%s169 + $0x78] sm:$0xf]
      %v216 = vld [vmem:[%s169 + $0x7c] sm:$0xf]
      %v217 = vld [vmem:[%s169 + $0x80] sm:$0xf]
      %v218 = vld [vmem:[%s169 + $0x84] sm:$0xf]
      %v219 = vld [vmem:[%s169 + $0x88] sm:$0xf]
      %v220 = vld [vmem:[%s169 + $0x8c] sm:$0xf]
      %v221 = vld [vmem:[%s169 + $0x90] sm:$0xf]
      %v222 = vld [vmem:[%s169 + $0x94] sm:$0xf]
      %v223 = vld [vmem:[%s169 + $0x98] sm:$0xf]
      %v224 = vld [vmem:[%s169 + $0x9c] sm:$0xf]
      %v225 = vld [vmem:[%s169 + $0xa0] sm:$0xf]
      %v226 = vld [vmem:[%s169 + $0xa4] sm:$0xf]
      %v227 = vld [vmem:[%s169 + $0xa8] sm:$0xf]
      %v228 = vld [vmem:[%s169 + $0xac] sm:$0xf]
      %v229 = vld [vmem:[%s169 + $0xb0] sm:$0xf]
      %v230 = vld [vmem:[%s169 + $0xb4] sm:$0xf]
      %v231 = vld [vmem:[%s169 + $0xb8] sm:$0xf]
      %v232 = vld [vmem:[%s169 + $0xbc] sm:$0xf]
      %v233 = vld [vmem:[%s169 + $0xc0] sm:$0xf]
      %v234 = vld [vmem:[%s169 + $0xc4] sm:$0xf]
      %v235 = vld [vmem:[%s169 + $0xc8] sm:$0xf]
      %v236 = vld [vmem:[%s169 + $0xcc] sm:$0xf]
      %v237 = vld [vmem:[%s169 + $0xd0] sm:$0xf]
      %v238 = vld [vmem:[%s169 + $0xd4] sm:$0xf]
      %v239 = vld [vmem:[%s169 + $0xd8] sm:$0xf]
      %v240 = vld [vmem:[%s169 + $0xdc] sm:$0xf]
      %v241 = vld [vmem:[%s169 + $0xe0] sm:$0xf]
      %v242 = vld [vmem:[%s169 + $0xe4] sm:$0xf]
      %v243 = vld [vmem:[%s169 + $0xe8] sm:$0xf]
      %v244 = vld [vmem:[%s169 + $0xec] sm:$0xf]
      %v245 = vld [vmem:[%s169 + $0xf0] sm:$0xf]
      %v246 = vld [vmem:[%s169 + $0xf4] sm:$0xf]
      %v247 = vld [vmem:[%s169 + $0xf8] sm:$0xf]
      %v248 = vld [vmem:[%s169 + $0xfc] sm:$0xf]
      %v249 = vld [vmem:[%s174] sm:$0xf]
      %v250 = vld [vmem:[%s174 + $0x4] sm:$0xf]
      %v251 = vld [vmem:[%s174 + $0x8] sm:$0xf]
      %v252 = vld [vmem:[%s174 + $0xc] sm:$0x3]
      %v317 = vunpack.c.l.b16 %v185
      %v318 = vunpack.c.l.b16 %v186
      %v319 = vunpack.c.l.b16 %v187
      %v320 = vunpack.c.l.b16 %v188
      %v321 = vunpack.c.l.b16 %v189
      %v322 = vunpack.c.l.b16 %v190
      %v323 = vunpack.c.l.b16 %v191
      %v324 = vunpack.c.l.b16 %v192
      %v325 = vunpack.c.l.b16 %v193
      %v326 = vunpack.c.l.b16 %v194
      %v327 = vunpack.c.l.b16 %v195
      %v328 = vunpack.c.l.b16 %v196
      %v329 = vunpack.c.l.b16 %v197
      %v330 = vunpack.c.l.b16 %v198
      %v331 = vunpack.c.l.b16 %v199
      %v332 = vunpack.c.l.b16 %v200
      %v333 = vunpack.c.l.b16 %v201
      %v334 = vunpack.c.l.b16 %v202
      %v335 = vunpack.c.l.b16 %v203
      %v336 = vunpack.c.l.b16 %v204
      %v337 = vunpack.c.l.b16 %v205
      %v338 = vunpack.c.l.b16 %v206
      %v339 = vunpack.c.l.b16 %v207
      %v340 = vunpack.c.l.b16 %v208
      %v341 = vunpack.c.l.b16 %v209
      %v342 = vunpack.c.l.b16 %v210
      %v343 = vunpack.c.l.b16 %v211
      %v344 = vunpack.c.l.b16 %v212
      %v345 = vunpack.c.l.b16 %v213
      %v346 = vunpack.c.l.b16 %v214
      %v347 = vunpack.c.l.b16 %v215
      %v348 = vunpack.c.l.b16 %v216
      %v349 = vunpack.c.l.b16 %v217
      %v350 = vunpack.c.l.b16 %v218
      %v351 = vunpack.c.l.b16 %v219
      %v352 = vunpack.c.l.b16 %v220
      %v353 = vunpack.c.l.b16 %v221
      %v354 = vunpack.c.l.b16 %v222
      %v355 = vunpack.c.l.b16 %v223
      %v356 = vunpack.c.l.b16 %v224
      %v357 = vunpack.c.l.b16 %v225
      %v358 = vunpack.c.l.b16 %v226
      %v359 = vunpack.c.l.b16 %v227
      %v360 = vunpack.c.l.b16 %v228
      %v361 = vunpack.c.l.b16 %v229
      %v362 = vunpack.c.l.b16 %v230
      %v363 = vunpack.c.l.b16 %v231
      %v364 = vunpack.c.l.b16 %v232
      %v365 = vunpack.c.l.b16 %v233
      %v366 = vunpack.c.l.b16 %v234
      %v367 = vunpack.c.l.b16 %v235
      %v368 = vunpack.c.l.b16 %v236
      %v369 = vunpack.c.l.b16 %v237
      %v370 = vunpack.c.l.b16 %v238
      %v371 = vunpack.c.l.b16 %v239
      %v372 = vunpack.c.l.b16 %v240
      %v373 = vunpack.c.l.b16 %v241
      %v374 = vunpack.c.l.b16 %v242
      %v375 = vunpack.c.l.b16 %v243
      %v376 = vunpack.c.l.b16 %v244
      %v377 = vunpack.c.l.b16 %v245
      %v378 = vunpack.c.l.b16 %v246
      %v379 = vunpack.c.l.b16 %v247
      %v380 = vunpack.c.l.b16 %v248
      %v381 = vpack.c.b16 %v318, %v317
      %v382 = vpack.c.b16 %v320, %v319
      %v383 = vpack.c.b16 %v322, %v321
      %v384 = vpack.c.b16 %v324, %v323
      %v385 = vpack.c.b16 %v326, %v325
      %v386 = vpack.c.b16 %v328, %v327
      %v387 = vpack.c.b16 %v330, %v329
      %v388 = vpack.c.b16 %v332, %v331
      %v389 = vpack.c.b16 %v334, %v333
      %v390 = vpack.c.b16 %v336, %v335
      %v391 = vpack.c.b16 %v338, %v337
      %v392 = vpack.c.b16 %v340, %v339
      %v393 = vpack.c.b16 %v342, %v341
      %v394 = vpack.c.b16 %v344, %v343
      %v395 = vpack.c.b16 %v346, %v345
      %v396 = vpack.c.b16 %v348, %v347
      %v397 = vpack.c.b16 %v350, %v349
      %v398 = vpack.c.b16 %v352, %v351
      %v399 = vpack.c.b16 %v354, %v353
      %v400 = vpack.c.b16 %v356, %v355
      %v401 = vpack.c.b16 %v358, %v357
      %v402 = vpack.c.b16 %v360, %v359
      %v403 = vpack.c.b16 %v362, %v361
      %v404 = vpack.c.b16 %v364, %v363
      %v405 = vpack.c.b16 %v366, %v365
      %v406 = vpack.c.b16 %v368, %v367
      %v407 = vpack.c.b16 %v370, %v369
      %v408 = vpack.c.b16 %v372, %v371
      %v409 = vpack.c.b16 %v374, %v373
      %v410 = vpack.c.b16 %v376, %v375
      %v411 = vpack.c.b16 %v378, %v377
      %v412 = vpack.c.b16 %v380, %v379
      %v417 = vunpack.c.l.b16 %v249
      %v418 = vunpack.c.l.b16 %v250
      %v419 = vunpack.c.l.b16 %v251
      %v420 = vunpack.c.l.b16 %v252
      %v421 = vpack.c.b16 %v418, %v417
      %v422 = vpack.c.b16 %v420, %v419
      %vm424 = vcmask 220160
      %v426 = vsel %vm424, %v381, 0
      %v429 = vsel %vm424, %v382, 0
      %v432 = vsel %vm424, %v383, 0
      %v435 = vsel %vm424, %v384, 0
      %v438 = vsel %vm424, %v385, 0
      %v441 = vsel %vm424, %v386, 0
      %v444 = vsel %vm424, %v387, 0
      %v447 = vsel %vm424, %v388, 0
      %v450 = vsel %vm424, %v389, 0
      %v453 = vsel %vm424, %v390, 0
      %v456 = vsel %vm424, %v391, 0
      %v459 = vsel %vm424, %v392, 0
      %v462 = vsel %vm424, %v393, 0
      %v465 = vsel %vm424, %v394, 0
      %v468 = vsel %vm424, %v395, 0
      %v471 = vsel %vm424, %v396, 0
      %v474 = vsel %vm424, %v397, 0
      %v477 = vsel %vm424, %v398, 0
      %v480 = vsel %vm424, %v399, 0
      %v483 = vsel %vm424, %v400, 0
      %v486 = vsel %vm424, %v401, 0
      %v489 = vsel %vm424, %v402, 0
      %v492 = vsel %vm424, %v403, 0
      %v495 = vsel %vm424, %v404, 0
      %v498 = vsel %vm424, %v405, 0
      %v501 = vsel %vm424, %v406, 0
      %v504 = vsel %vm424, %v407, 0
      %v507 = vsel %vm424, %v408, 0
      %v510 = vsel %vm424, %v409, 0
      %v513 = vsel %vm424, %v410, 0
      %v516 = vsel %vm424, %v411, 0
      %v519 = vsel %vm424, %v412, 0
      %vm521 = vcmask 1044480
      %vm522 = vcmask 1045504
      %v523 = vsel %vm521, 4294967295, 65535
      %v524 = vsel %vm522, %v523, 0
      %v526 = vand.u32 %v422, %v524
      %528 = vmatprep.subr.bf16.mxu0 0
      %529 = vmatpush1.bf16.msra.mxu0 0
      %530 = vmatprep.subr.bf16.mxu0 0
      %531 = vmatpush1.bf16.msra.mxu0 0
      %532 = vmatprep.subr.bf16.mxu0 0
      %533 = vmatpush1.bf16.msra.mxu0 0
      %534 = vmatprep.subr.bf16.mxu0 0
      %535 = vmatpush1.bf16.msra.mxu0 0
      %536 = vmatprep.subr.bf16.mxu0 0
      %537 = vmatpush1.bf16.msra.mxu0 0
      %538 = vmatprep.subr.bf16.mxu0 0
      %539 = vmatpush1.bf16.msra.mxu0 0
      %540 = vmatprep.subr.bf16.mxu0 0
      %541 = vmatpush1.bf16.msra.mxu0 %v526
      %542 = vmatprep.subr.bf16.mxu0 0
      %543 = vmatpush1.bf16.msra.mxu0 %v421
      %544 = vmatprep.subr.bf16.mxu0 0
      %545 = vmatpush2.bf16.msra.mxu0 0
      %546 = vmatprep.subr.bf16.mxu0 0
      %547 = vmatpush2.bf16.msra.mxu0 0
      %548 = vmatprep.subr.bf16.mxu0 0
      %549 = vmatpush2.bf16.msra.mxu0 0
      %550 = vmatprep.subr.bf16.mxu0 0
      %551 = vmatpush2.bf16.msra.mxu0 0
      %552 = vmatprep.subr.bf16.mxu0 0
      %553 = vmatpush2.bf16.msra.mxu0 0
      %554 = vmatprep.subr.bf16.mxu0 0
      %555 = vmatpush2.bf16.msra.mxu0 0
      %556 = vmatprep.subr.bf16.mxu0 0
      %557 = vmatpush2.bf16.msra.mxu0 0
      %558 = vmatprep.subr.bf16.mxu0 0
      %559 = vmatpush2.bf16.msra.mxu0 0
      %560 = vmatprep.mubr.bf16.mxu0 0
      %561 = vmatmul.mubr.bf16.gmra.mxu0 %v426
      %v562 = vpop.f32.mrf.mxu0
      %v563 = vadd.f32 0.0, %v562
      %v564 = vpop.f32.mrf.mxu0
      %v565 = vpop.f32.mrf.mxu0
      %v566 = vadd.f32 0.0, %v565
      %v567 = vpop.f32.mrf.mxu0
      %568 = vmatprep.mubr.bf16.mxu0 0
      %569 = vmatmul.mubr.bf16.gmra.mxu0 %v429
      %v570 = vpop.f32.mrf.mxu0
      %v571 = vadd.f32 0.0, %v570
      %v572 = vpop.f32.mrf.mxu0
      %v573 = vpop.f32.mrf.mxu0
      %v574 = vadd.f32 0.0, %v573
      %v575 = vpop.f32.mrf.mxu0
      %576 = vmatprep.mubr.bf16.mxu0 0
      %577 = vmatmul.mubr.bf16.gmra.mxu0 %v432
      %v578 = vpop.f32.mrf.mxu0
      %v579 = vadd.f32 0.0, %v578
      %v580 = vpop.f32.mrf.mxu0
      %v581 = vpop.f32.mrf.mxu0
      %v582 = vadd.f32 0.0, %v581
      %v583 = vpop.f32.mrf.mxu0
      %584 = vmatprep.mubr.bf16.mxu0 0
      %585 = vmatmul.mubr.bf16.gmra.mxu0 %v435
      %v586 = vpop.f32.mrf.mxu0
      %v587 = vadd.f32 0.0, %v586
      %v588 = vpop.f32.mrf.mxu0
      %v589 = vpop.f32.mrf.mxu0
      %v590 = vadd.f32 0.0, %v589
      %v591 = vpop.f32.mrf.mxu0
      %592 = vmatprep.mubr.bf16.mxu0 0
      %593 = vmatmul.mubr.bf16.gmra.mxu0 %v438
      %v594 = vpop.f32.mrf.mxu0
      %v595 = vadd.f32 0.0, %v594
      %v596 = vpop.f32.mrf.mxu0
      %v597 = vpop.f32.mrf.mxu0
      %v598 = vadd.f32 0.0, %v597
      %v599 = vpop.f32.mrf.mxu0
      %600 = vmatprep.mubr.bf16.mxu0 0
      %601 = vmatmul.mubr.bf16.gmra.mxu0 %v441
      %v602 = vpop.f32.mrf.mxu0
      %v603 = vadd.f32 0.0, %v602
      %v604 = vpop.f32.mrf.mxu0
      %v605 = vpop.f32.mrf.mxu0
      %v606 = vadd.f32 0.0, %v605
      %v607 = vpop.f32.mrf.mxu0
      %608 = vmatprep.mubr.bf16.mxu0 0
      %609 = vmatmul.mubr.bf16.gmra.mxu0 %v444
      %v610 = vpop.f32.mrf.mxu0
      %v611 = vadd.f32 0.0, %v610
      %v612 = vpop.f32.mrf.mxu0
      %v613 = vpop.f32.mrf.mxu0
      %v614 = vadd.f32 0.0, %v613
      %v615 = vpop.f32.mrf.mxu0
      %616 = vmatprep.mubr.bf16.mxu0 0
      %617 = vmatmul.mubr.bf16.gmra.mxu0 %v447
      %v618 = vpop.f32.mrf.mxu0
      %v619 = vadd.f32 0.0, %v618
      %v620 = vpop.f32.mrf.mxu0
      %v621 = vpop.f32.mrf.mxu0
      %v622 = vadd.f32 0.0, %v621
      %v623 = vpop.f32.mrf.mxu0
      %624 = vmatprep.mubr.bf16.mxu0 0
      %625 = vmatmul.mubr.bf16.gmra.mxu0 %v450
      %v626 = vpop.f32.mrf.mxu0
      %v627 = vadd.f32 0.0, %v626
      %v628 = vpop.f32.mrf.mxu0
      %v629 = vpop.f32.mrf.mxu0
      %v630 = vadd.f32 0.0, %v629
      %v631 = vpop.f32.mrf.mxu0
      %632 = vmatprep.mubr.bf16.mxu0 0
      %633 = vmatmul.mubr.bf16.gmra.mxu0 %v453
      %v634 = vpop.f32.mrf.mxu0
      %v635 = vadd.f32 0.0, %v634
      %v636 = vpop.f32.mrf.mxu0
      %v637 = vpop.f32.mrf.mxu0
      %v638 = vadd.f32 0.0, %v637
      %v639 = vpop.f32.mrf.mxu0
      %640 = vmatprep.mubr.bf16.mxu0 0
      %641 = vmatmul.mubr.bf16.gmra.mxu0 %v456
      %v642 = vpop.f32.mrf.mxu0
      %v643 = vadd.f32 0.0, %v642
      %v644 = vpop.f32.mrf.mxu0
      %v645 = vpop.f32.mrf.mxu0
      %v646 = vadd.f32 0.0, %v645
      %v647 = vpop.f32.mrf.mxu0
      %648 = vmatprep.mubr.bf16.mxu0 0
      %649 = vmatmul.mubr.bf16.gmra.mxu0 %v459
      %v650 = vpop.f32.mrf.mxu0
      %v651 = vadd.f32 0.0, %v650
      %v652 = vpop.f32.mrf.mxu0
      %v653 = vpop.f32.mrf.mxu0
      %v654 = vadd.f32 0.0, %v653
      %v655 = vpop.f32.mrf.mxu0
      %656 = vmatprep.mubr.bf16.mxu0 0
      %657 = vmatmul.mubr.bf16.gmra.mxu0 %v462
      %v658 = vpop.f32.mrf.mxu0
      %v659 = vadd.f32 0.0, %v658
      %v660 = vpop.f32.mrf.mxu0
      %v661 = vpop.f32.mrf.mxu0
      %v662 = vadd.f32 0.0, %v661
      %v663 = vpop.f32.mrf.mxu0
      %664 = vmatprep.mubr.bf16.mxu0 0
      %665 = vmatmul.mubr.bf16.gmra.mxu0 %v465
      %v666 = vpop.f32.mrf.mxu0
      %v667 = vadd.f32 0.0, %v666
      %v668 = vpop.f32.mrf.mxu0
      %v669 = vpop.f32.mrf.mxu0
      %v670 = vadd.f32 0.0, %v669
      %v671 = vpop.f32.mrf.mxu0
      %672 = vmatprep.mubr.bf16.mxu0 0
      %673 = vmatmul.mubr.bf16.gmra.mxu0 %v468
      %v674 = vpop.f32.mrf.mxu0
      %v675 = vadd.f32 0.0, %v674
      %v676 = vpop.f32.mrf.mxu0
      %v677 = vpop.f32.mrf.mxu0
      %v678 = vadd.f32 0.0, %v677
      %v679 = vpop.f32.mrf.mxu0
      %680 = vmatprep.mubr.bf16.mxu0 0
      %681 = vmatmul.mubr.bf16.gmra.mxu0 %v471
      %v682 = vpop.f32.mrf.mxu0
      %v683 = vadd.f32 0.0, %v682
      %v684 = vpop.f32.mrf.mxu0
      %v685 = vpop.f32.mrf.mxu0
      %v686 = vadd.f32 0.0, %v685
      %v687 = vpop.f32.mrf.mxu0
      %688 = vmatprep.mubr.bf16.mxu0 0
      %689 = vmatmul.mubr.bf16.gmra.mxu0 %v474
      %v690 = vpop.f32.mrf.mxu0
      %v691 = vadd.f32 0.0, %v690
      %v692 = vpop.f32.mrf.mxu0
      %v693 = vpop.f32.mrf.mxu0
      %v694 = vadd.f32 0.0, %v693
      %v695 = vpop.f32.mrf.mxu0
      %696 = vmatprep.mubr.bf16.mxu0 0
      %697 = vmatmul.mubr.bf16.gmra.mxu0 %v477
      %v698 = vpop.f32.mrf.mxu0
      %v699 = vadd.f32 0.0, %v698
      %v700 = vpop.f32.mrf.mxu0
      %v701 = vpop.f32.mrf.mxu0
      %v702 = vadd.f32 0.0, %v701
      %v703 = vpop.f32.mrf.mxu0
      %704 = vmatprep.mubr.bf16.mxu0 0
      %705 = vmatmul.mubr.bf16.gmra.mxu0 %v480
      %v706 = vpop.f32.mrf.mxu0
      %v707 = vadd.f32 0.0, %v706
      %v708 = vpop.f32.mrf.mxu0
      %v709 = vpop.f32.mrf.mxu0
      %v710 = vadd.f32 0.0, %v709
      %v711 = vpop.f32.mrf.mxu0
      %712 = vmatprep.mubr.bf16.mxu0 0
      %713 = vmatmul.mubr.bf16.gmra.mxu0 %v483
      %v714 = vpop.f32.mrf.mxu0
      %v715 = vadd.f32 0.0, %v714
      %v716 = vpop.f32.mrf.mxu0
      %v717 = vpop.f32.mrf.mxu0
      %v718 = vadd.f32 0.0, %v717
      %v719 = vpop.f32.mrf.mxu0
      %720 = vmatprep.mubr.bf16.mxu0 0
      %721 = vmatmul.mubr.bf16.gmra.mxu0 %v486
      %v722 = vpop.f32.mrf.mxu0
      %v723 = vadd.f32 0.0, %v722
      %v724 = vpop.f32.mrf.mxu0
      %v725 = vpop.f32.mrf.mxu0
      %v726 = vadd.f32 0.0, %v725
      %v727 = vpop.f32.mrf.mxu0
      %728 = vmatprep.mubr.bf16.mxu0 0
      %729 = vmatmul.mubr.bf16.gmra.mxu0 %v489
      %v730 = vpop.f32.mrf.mxu0
      %v731 = vadd.f32 0.0, %v730
      %v732 = vpop.f32.mrf.mxu0
      %v733 = vpop.f32.mrf.mxu0
      %v734 = vadd.f32 0.0, %v733
      %v735 = vpop.f32.mrf.mxu0
      %736 = vmatprep.mubr.bf16.mxu0 0
      %737 = vmatmul.mubr.bf16.gmra.mxu0 %v492
      %v738 = vpop.f32.mrf.mxu0
      %v739 = vadd.f32 0.0, %v738
      %v740 = vpop.f32.mrf.mxu0
      %v741 = vpop.f32.mrf.mxu0
      %v742 = vadd.f32 0.0, %v741
      %v743 = vpop.f32.mrf.mxu0
      %744 = vmatprep.mubr.bf16.mxu0 0
      %745 = vmatmul.mubr.bf16.gmra.mxu0 %v495
      %v746 = vpop.f32.mrf.mxu0
      %v747 = vadd.f32 0.0, %v746
      %v748 = vpop.f32.mrf.mxu0
      %v749 = vpop.f32.mrf.mxu0
      %v750 = vadd.f32 0.0, %v749
      %v751 = vpop.f32.mrf.mxu0
      %752 = vmatprep.mubr.bf16.mxu0 0
      %753 = vmatmul.mubr.bf16.gmra.mxu0 %v498
      %v754 = vpop.f32.mrf.mxu0
      %v755 = vadd.f32 0.0, %v754
      %v756 = vpop.f32.mrf.mxu0
      %v757 = vpop.f32.mrf.mxu0
      %v758 = vadd.f32 0.0, %v757
      %v759 = vpop.f32.mrf.mxu0
      %760 = vmatprep.mubr.bf16.mxu0 0
      %761 = vmatmul.mubr.bf16.gmra.mxu0 %v501
      %v762 = vpop.f32.mrf.mxu0
      %v763 = vadd.f32 0.0, %v762
      %v764 = vpop.f32.mrf.mxu0
      %v765 = vpop.f32.mrf.mxu0
      %v766 = vadd.f32 0.0, %v765
      %v767 = vpop.f32.mrf.mxu0
      %768 = vmatprep.mubr.bf16.mxu0 0
      %769 = vmatmul.mubr.bf16.gmra.mxu0 %v504
      %v770 = vpop.f32.mrf.mxu0
      %v771 = vadd.f32 0.0, %v770
      %v772 = vpop.f32.mrf.mxu0
      %v773 = vpop.f32.mrf.mxu0
      %v774 = vadd.f32 0.0, %v773
      %v775 = vpop.f32.mrf.mxu0
      %776 = vmatprep.mubr.bf16.mxu0 0
      %777 = vmatmul.mubr.bf16.gmra.mxu0 %v507
      %v778 = vpop.f32.mrf.mxu0
      %v779 = vadd.f32 0.0, %v778
      %v780 = vpop.f32.mrf.mxu0
      %v781 = vpop.f32.mrf.mxu0
      %v782 = vadd.f32 0.0, %v781
      %v783 = vpop.f32.mrf.mxu0
      %784 = vmatprep.mubr.bf16.mxu0 0
      %785 = vmatmul.mubr.bf16.gmra.mxu0 %v510
      %v786 = vpop.f32.mrf.mxu0
      %v787 = vadd.f32 0.0, %v786
      %v788 = vpop.f32.mrf.mxu0
      %v789 = vpop.f32.mrf.mxu0
      %v790 = vadd.f32 0.0, %v789
      %v791 = vpop.f32.mrf.mxu0
      %792 = vmatprep.mubr.bf16.mxu0 0
      %793 = vmatmul.mubr.bf16.gmra.mxu0 %v513
      %v794 = vpop.f32.mrf.mxu0
      %v795 = vadd.f32 0.0, %v794
      %v796 = vpop.f32.mrf.mxu0
      %v797 = vpop.f32.mrf.mxu0
      %v798 = vadd.f32 0.0, %v797
      %v799 = vpop.f32.mrf.mxu0
      %800 = vmatprep.mubr.bf16.mxu0 0
      %801 = vmatmul.mubr.bf16.gmra.mxu0 %v516
      %v802 = vpop.f32.mrf.mxu0
      %v803 = vadd.f32 0.0, %v802
      %v804 = vpop.f32.mrf.mxu0
      %v805 = vpop.f32.mrf.mxu0
      %v806 = vadd.f32 0.0, %v805
      %v807 = vpop.f32.mrf.mxu0
      %808 = vmatprep.mubr.bf16.mxu0 0
      %809 = vmatmul.mubr.bf16.gmra.mxu0 %v519
      %v810 = vpop.f32.mrf.mxu0
      %v811 = vadd.f32 0.0, %v810
      %v812 = vpop.f32.mrf.mxu0
      %v813 = vpop.f32.mrf.mxu0
      %v814 = vadd.f32 0.0, %v813
      %v815 = vpop.f32.mrf.mxu0
      %816 = vdwg.mxu0
      %v817 = vpack.c.bf16 %v566, %v563
      %v818 = vpack.c.bf16 %v574, %v571
      %v819 = vpack.c.bf16 %v582, %v579
      %v820 = vpack.c.bf16 %v590, %v587
      %v821 = vpack.c.bf16 %v598, %v595
      %v822 = vpack.c.bf16 %v606, %v603
      %v823 = vpack.c.bf16 %v614, %v611
      %v824 = vpack.c.bf16 %v622, %v619
      %v825 = vpack.c.bf16 %v630, %v627
      %v826 = vpack.c.bf16 %v638, %v635
      %v827 = vpack.c.bf16 %v646, %v643
      %v828 = vpack.c.bf16 %v654, %v651
      %v829 = vpack.c.bf16 %v662, %v659
      %v830 = vpack.c.bf16 %v670, %v667
      %v831 = vpack.c.bf16 %v678, %v675
      %v832 = vpack.c.bf16 %v686, %v683
      %v833 = vpack.c.bf16 %v694, %v691
      %v834 = vpack.c.bf16 %v702, %v699
      %v835 = vpack.c.bf16 %v710, %v707
      %v836 = vpack.c.bf16 %v718, %v715
      %v837 = vpack.c.bf16 %v726, %v723
      %v838 = vpack.c.bf16 %v734, %v731
      %v839 = vpack.c.bf16 %v742, %v739
      %v840 = vpack.c.bf16 %v750, %v747
      %v841 = vpack.c.bf16 %v758, %v755
      %v842 = vpack.c.bf16 %v766, %v763
      %v843 = vpack.c.bf16 %v774, %v771
      %v844 = vpack.c.bf16 %v782, %v779
      %v845 = vpack.c.bf16 %v790, %v787
      %v846 = vpack.c.bf16 %v798, %v795
      %v847 = vpack.c.bf16 %v806, %v803
      %v848 = vpack.c.bf16 %v814, %v811
      %v881 = vunpack.c.l.b16 %v817
      %v882 = vunpack.c.h.b16 %v817
      %v883 = vunpack.c.l.b16 %v818
      %v884 = vunpack.c.h.b16 %v818
      %v885 = vunpack.c.l.b16 %v819
      %v886 = vunpack.c.h.b16 %v819
      %v887 = vunpack.c.l.b16 %v820
      %v888 = vunpack.c.h.b16 %v820
      %v889 = vunpack.c.l.b16 %v821
      %v890 = vunpack.c.h.b16 %v821
      %v891 = vunpack.c.l.b16 %v822
      %v892 = vunpack.c.h.b16 %v822
      %v893 = vunpack.c.l.b16 %v823
      %v894 = vunpack.c.h.b16 %v823
      %v895 = vunpack.c.l.b16 %v824
      %v896 = vunpack.c.h.b16 %v824
      %v897 = vunpack.c.l.b16 %v825
      %v898 = vunpack.c.h.b16 %v825
      %v899 = vunpack.c.l.b16 %v826
      %v900 = vunpack.c.h.b16 %v826
      %v901 = vunpack.c.l.b16 %v827
      %v902 = vunpack.c.h.b16 %v827
      %v903 = vunpack.c.l.b16 %v828
      %v904 = vunpack.c.h.b16 %v828
      %v905 = vunpack.c.l.b16 %v829
      %v906 = vunpack.c.h.b16 %v829
      %v907 = vunpack.c.l.b16 %v830
      %v908 = vunpack.c.h.b16 %v830
      %v909 = vunpack.c.l.b16 %v831
      %v910 = vunpack.c.h.b16 %v831
      %v911 = vunpack.c.l.b16 %v832
      %v912 = vunpack.c.h.b16 %v832
      %v913 = vunpack.c.l.b16 %v833
      %v914 = vunpack.c.h.b16 %v833
      %v915 = vunpack.c.l.b16 %v834
      %v916 = vunpack.c.h.b16 %v834
      %v917 = vunpack.c.l.b16 %v835
      %v918 = vunpack.c.h.b16 %v835
      %v919 = vunpack.c.l.b16 %v836
      %v920 = vunpack.c.h.b16 %v836
      %v921 = vunpack.c.l.b16 %v837
      %v922 = vunpack.c.h.b16 %v837
      %v923 = vunpack.c.l.b16 %v838
      %v924 = vunpack.c.h.b16 %v838
      %v925 = vunpack.c.l.b16 %v839
      %v926 = vunpack.c.h.b16 %v839
      %v927 = vunpack.c.l.b16 %v840
      %v928 = vunpack.c.h.b16 %v840
      %v929 = vunpack.c.l.b16 %v841
      %v930 = vunpack.c.h.b16 %v841
      %v931 = vunpack.c.l.b16 %v842
      %v932 = vunpack.c.h.b16 %v842
      %v933 = vunpack.c.l.b16 %v843
      %v934 = vunpack.c.h.b16 %v843
      %v935 = vunpack.c.l.b16 %v844
      %v936 = vunpack.c.h.b16 %v844
      %v937 = vunpack.c.l.b16 %v845
      %v938 = vunpack.c.h.b16 %v845
      %v939 = vunpack.c.l.b16 %v846
      %v940 = vunpack.c.h.b16 %v846
      %v941 = vunpack.c.l.b16 %v847
      %v942 = vunpack.c.h.b16 %v847
      %v943 = vunpack.c.l.b16 %v848
      %v944 = vunpack.c.h.b16 %v848
      %v945 = vpack.c.b16 %v881, %v881
      %v946 = vpack.c.b16 %v882, %v882
      %v947 = vpack.c.b16 %v883, %v883
      %v948 = vpack.c.b16 %v884, %v884
      %v949 = vpack.c.b16 %v885, %v885
      %v950 = vpack.c.b16 %v886, %v886
      %v951 = vpack.c.b16 %v887, %v887
      %v952 = vpack.c.b16 %v888, %v888
      %v953 = vpack.c.b16 %v889, %v889
      %v954 = vpack.c.b16 %v890, %v890
      %v955 = vpack.c.b16 %v891, %v891
      %v956 = vpack.c.b16 %v892, %v892
      %v957 = vpack.c.b16 %v893, %v893
      %v958 = vpack.c.b16 %v894, %v894
      %v959 = vpack.c.b16 %v895, %v895
      %v960 = vpack.c.b16 %v896, %v896
      %v961 = vpack.c.b16 %v897, %v897
      %v962 = vpack.c.b16 %v898, %v898
      %v963 = vpack.c.b16 %v899, %v899
      %v964 = vpack.c.b16 %v900, %v900
      %v965 = vpack.c.b16 %v901, %v901
      %v966 = vpack.c.b16 %v902, %v902
      %v967 = vpack.c.b16 %v903, %v903
      %v968 = vpack.c.b16 %v904, %v904
      %v969 = vpack.c.b16 %v905, %v905
      %v970 = vpack.c.b16 %v906, %v906
      %v971 = vpack.c.b16 %v907, %v907
      %v972 = vpack.c.b16 %v908, %v908
      %v973 = vpack.c.b16 %v909, %v909
      %v974 = vpack.c.b16 %v910, %v910
      %v975 = vpack.c.b16 %v911, %v911
      %v976 = vpack.c.b16 %v912, %v912
      %v977 = vpack.c.b16 %v913, %v913
      %v978 = vpack.c.b16 %v914, %v914
      %v979 = vpack.c.b16 %v915, %v915
      %v980 = vpack.c.b16 %v916, %v916
      %v981 = vpack.c.b16 %v917, %v917
      %v982 = vpack.c.b16 %v918, %v918
      %v983 = vpack.c.b16 %v919, %v919
      %v984 = vpack.c.b16 %v920, %v920
      %v985 = vpack.c.b16 %v921, %v921
      %v986 = vpack.c.b16 %v922, %v922
      %v987 = vpack.c.b16 %v923, %v923
      %v988 = vpack.c.b16 %v924, %v924
      %v989 = vpack.c.b16 %v925, %v925
      %v990 = vpack.c.b16 %v926, %v926
      %v991 = vpack.c.b16 %v927, %v927
      %v992 = vpack.c.b16 %v928, %v928
      %v993 = vpack.c.b16 %v929, %v929
      %v994 = vpack.c.b16 %v930, %v930
      %v995 = vpack.c.b16 %v931, %v931
      %v996 = vpack.c.b16 %v932, %v932
      %v997 = vpack.c.b16 %v933, %v933
      %v998 = vpack.c.b16 %v934, %v934
      %v999 = vpack.c.b16 %v935, %v935
      %v1000 = vpack.c.b16 %v936, %v936
      %v1001 = vpack.c.b16 %v937, %v937
      %v1002 = vpack.c.b16 %v938, %v938
      %v1003 = vpack.c.b16 %v939, %v939
      %v1004 = vpack.c.b16 %v940, %v940
      %v1005 = vpack.c.b16 %v941, %v941
      %v1006 = vpack.c.b16 %v942, %v942
      %v1007 = vpack.c.b16 %v943, %v943
      %v1008 = vpack.c.b16 %v944, %v944
      %vm1073 = vcmask 257024
      %1074 = vst.msk [vmem:[%s182] sm:$0xf] %vm1073, %v945
      %1075 = vst.msk [vmem:[%s182 + $0x4] sm:$0xf] %vm1073, %v946
      %1076 = vst.msk [vmem:[%s182 + $0x8] sm:$0xf] %vm1073, %v947
      %1077 = vst.msk [vmem:[%s182 + $0xc] sm:$0xf] %vm1073, %v948
      %1078 = vst.msk [vmem:[%s182 + $0x10] sm:$0xf] %vm1073, %v949
      %1079 = vst.msk [vmem:[%s182 + $0x14] sm:$0xf] %vm1073, %v950
      %1080 = vst.msk [vmem:[%s182 + $0x18] sm:$0xf] %vm1073, %v951
      %1081 = vst.msk [vmem:[%s182 + $0x1c] sm:$0xf] %vm1073, %v952
      %1082 = vst.msk [vmem:[%s182 + $0x20] sm:$0xf] %vm1073, %v953
      %1083 = vst.msk [vmem:[%s182 + $0x24] sm:$0xf] %vm1073, %v954
      %1084 = vst.msk [vmem:[%s182 + $0x28] sm:$0xf] %vm1073, %v955
      %1085 = vst.msk [vmem:[%s182 + $0x2c] sm:$0xf] %vm1073, %v956
      %1086 = vst.msk [vmem:[%s182 + $0x30] sm:$0xf] %vm1073, %v957
      %1087 = vst.msk [vmem:[%s182 + $0x34] sm:$0xf] %vm1073, %v958
      %1088 = vst.msk [vmem:[%s182 + $0x38] sm:$0xf] %vm1073, %v959
      %1089 = vst.msk [vmem:[%s182 + $0x3c] sm:$0xf] %vm1073, %v960
      %1090 = vst.msk [vmem:[%s182 + $0x40] sm:$0xf] %vm1073, %v961
      %1091 = vst.msk [vmem:[%s182 + $0x44] sm:$0xf] %vm1073, %v962
      %1092 = vst.msk [vmem:[%s182 + $0x48] sm:$0xf] %vm1073, %v963
      %1093 = vst.msk [vmem:[%s182 + $0x4c] sm:$0xf] %vm1073, %v964
      %1094 = vst.msk [vmem:[%s182 + $0x50] sm:$0xf] %vm1073, %v965
      %1095 = vst.msk [vmem:[%s182 + $0x54] sm:$0xf] %vm1073, %v966
      %1096 = vst.msk [vmem:[%s182 + $0x58] sm:$0xf] %vm1073, %v967
      %1097 = vst.msk [vmem:[%s182 + $0x5c] sm:$0xf] %vm1073, %v968
      %1098 = vst.msk [vmem:[%s182 + $0x60] sm:$0xf] %vm1073, %v969
      %1099 = vst.msk [vmem:[%s182 + $0x64] sm:$0xf] %vm1073, %v970
      %1100 = vst.msk [vmem:[%s182 + $0x68] sm:$0xf] %vm1073, %v971
      %1101 = vst.msk [vmem:[%s182 + $0x6c] sm:$0xf] %vm1073, %v972
      %1102 = vst.msk [vmem:[%s182 + $0x70] sm:$0xf] %vm1073, %v973
      %1103 = vst.msk [vmem:[%s182 + $0x74] sm:$0xf] %vm1073, %v974
      %1104 = vst.msk [vmem:[%s182 + $0x78] sm:$0xf] %vm1073, %v975
      %1105 = vst.msk [vmem:[%s182 + $0x7c] sm:$0xf] %vm1073, %v976
      %1106 = vst.msk [vmem:[%s182 + $0x80] sm:$0xf] %vm1073, %v977
      %1107 = vst.msk [vmem:[%s182 + $0x84] sm:$0xf] %vm1073, %v978
      %1108 = vst.msk [vmem:[%s182 + $0x88] sm:$0xf] %vm1073, %v979
      %1109 = vst.msk [vmem:[%s182 + $0x8c] sm:$0xf] %vm1073, %v980
      %1110 = vst.msk [vmem:[%s182 + $0x90] sm:$0xf] %vm1073, %v981
      %1111 = vst.msk [vmem:[%s182 + $0x94] sm:$0xf] %vm1073, %v982
      %1112 = vst.msk [vmem:[%s182 + $0x98] sm:$0xf] %vm1073, %v983
      %1113 = vst.msk [vmem:[%s182 + $0x9c] sm:$0xf] %vm1073, %v984
      %1114 = vst.msk [vmem:[%s182 + $0xa0] sm:$0xf] %vm1073, %v985
      %1115 = vst.msk [vmem:[%s182 + $0xa4] sm:$0xf] %vm1073, %v986
      %1116 = vst.msk [vmem:[%s182 + $0xa8] sm:$0xf] %vm1073, %v987
      %1117 = vst.msk [vmem:[%s182 + $0xac] sm:$0xf] %vm1073, %v988
      %1118 = vst.msk [vmem:[%s182 + $0xb0] sm:$0xf] %vm1073, %v989
      %1119 = vst.msk [vmem:[%s182 + $0xb4] sm:$0xf] %vm1073, %v990
      %1120 = vst.msk [vmem:[%s182 + $0xb8] sm:$0xf] %vm1073, %v991
      %1121 = vst.msk [vmem:[%s182 + $0xbc] sm:$0xf] %vm1073, %v992
      %1122 = vst.msk [vmem:[%s182 + $0xc0] sm:$0xf] %vm1073, %v993
      %1123 = vst.msk [vmem:[%s182 + $0xc4] sm:$0xf] %vm1073, %v994
      %1124 = vst.msk [vmem:[%s182 + $0xc8] sm:$0xf] %vm1073, %v995
      %1125 = vst.msk [vmem:[%s182 + $0xcc] sm:$0xf] %vm1073, %v996
      %1126 = vst.msk [vmem:[%s182 + $0xd0] sm:$0xf] %vm1073, %v997
      %1127 = vst.msk [vmem:[%s182 + $0xd4] sm:$0xf] %vm1073, %v998
      %1128 = vst.msk [vmem:[%s182 + $0xd8] sm:$0xf] %vm1073, %v999
      %1129 = vst.msk [vmem:[%s182 + $0xdc] sm:$0xf] %vm1073, %v1000
      %1130 = vst.msk [vmem:[%s182 + $0xe0] sm:$0xf] %vm1073, %v1001
      %1131 = vst.msk [vmem:[%s182 + $0xe4] sm:$0xf] %vm1073, %v1002
      %1132 = vst.msk [vmem:[%s182 + $0xe8] sm:$0xf] %vm1073, %v1003
      %1133 = vst.msk [vmem:[%s182 + $0xec] sm:$0xf] %vm1073, %v1004
      %1134 = vst.msk [vmem:[%s182 + $0xf0] sm:$0xf] %vm1073, %v1005
      %1135 = vst.msk [vmem:[%s182 + $0xf4] sm:$0xf] %vm1073, %v1006
      %1136 = vst.msk [vmem:[%s182 + $0xf8] sm:$0xf] %vm1073, %v1007
      %1137 = vst.msk [vmem:[%s182 + $0xfc] sm:$0xf] %vm1073, %v1008
      %s1138 = smul.u32 64, %s17
      %p1139 = scmp.lt.s32.totalorder %s1138, 3135
      %s1140 = scalar_select %p1139, %s1138, 3135
      %p1141 = scmp.lt.s32.totalorder %s18, 0
      %s1142 = scalar_select %p1141, %s18, 0
      %s1143 = sadd.s32 %s1142, %s1140
      %s1144 = smul.addr %s1143, 4
      %s1145 = scalar_lea.vmem %s2, %s1144
      // Predicated region
      $region29: #{pallas_matmul.1} parent=27 // pred_check
        %p1146 = pneg %p97
      $region30: #{pallas_matmul.1} parent=27 // pred_check_branch
        %1148 = sbr.rel (%p1146) target = $region32
      $region31: #{pallas_matmul.1} parent=27 // pred_region
        %s1149 = smul.u32 64, %s17
      $region32: #{pallas_matmul.1} parent=27 // pred_fallthru
        _
    $region28: #{pallas_matmul.1} parent=5 // pred_fallthru
      _
    %p1150 = scmp.le.s32.totalorder 2, %s8
    // Predicated region
    $region33: #{pallas_matmul.1} parent=5 // pred_check
      %p1151 = pneg %p1150
    $region34: #{pallas_matmul.1} parent=5 // pred_check_branch
      %1153 = sbr.rel (%p1151) target = $region36
    $region35: #{pallas_matmul.1} parent=5 // pred_region
      %s1154 = ssub.s32 %s8, 2
      // Predicated region
      $region37: #{pallas_matmul.1} parent=35 // pred_check
        %p1155 = pneg %p103
      $region38: #{pallas_matmul.1} parent=35 // pred_check_branch
        %1157 = sbr.rel (%p1155) target = $region40
      $region39: #{pallas_matmul.1} parent=35 // pred_region
        %s1158 = smul.u32 64, %s19
        %p1159 = scmp.lt.s32.totalorder %s1158, 3135
        %s1160 = scalar_select %p1159, %s1158, 3135
        %p1161 = scmp.lt.s32.totalorder %s20, 0
        %s1162 = scalar_select %p1161, %s20, 0
        %s1163 = sadd.s32 %s1162, %s1160
        %s1164 = smul.addr %s1163, 4
        %s1165 = scalar_lea.vmem %s2, %s1164
      $region40: #{pallas_matmul.1} parent=35 // pred_fallthru
        _
    $region36: #{pallas_matmul.1} parent=5 // pred_fallthru
      _
  $region6: #{pallas_matmul.1} parent=0 // loop_footer
    %s12 = sadd.s32 1, %s8
  $region7: #{pallas_matmul.1} parent=0 // loop_footer_branch
    %7 = sbr.rel target = $region3
  $region8: #{pallas_matmul.1} parent=0 // loop_exit
    _

</llo_original>
